<compile_context>
chip_gen: v7x
topology: tpu7x:2x2x1
jax: 0.10.0
libtpu: 0.0.40
codegen_flags: <defaults>
</compile_context>

<pallas_src>
import functools

import jax
import jax.numpy as jnp
from jax.experimental import pallas as pl
from jax.experimental.pallas import tpu as pltpu


def _round_up(v, m):
    return ((v + m - 1) // m) * m


def _disc_kernel(*refs, training: bool, h1: int, h2: int):
    """Fused 3-layer MLP on row-grouped (lane-dense) operands.

    Shapes (G = 8 row-group factor, R = row_tile // G):
      x_ref : (R, G*c_in)    bf16/f32
      wK_ref: block-diagonal kron(I_G, W_K), bf16/f32
      bK_ref: (1, G*hK)      f32
      bits  : (R, G*max(h1,h2)) uint32   (training only)
      o_ref : (R, G*c_out)   f32
    """
    if training:
        (bits_ref, x_ref, w1_ref, b1_ref, w2_ref, b2_ref,
         w3_ref, b3_ref, o_ref) = refs
        bits = bits_ref[...]
    else:
        (x_ref, w1_ref, b1_ref, w2_ref, b2_ref, w3_ref, b3_ref, o_ref) = refs

    x = x_ref[...]

    # ---- lin1 + ReLU (+ dropout p=0.5) ----
    h = jnp.dot(x, w1_ref[...], preferred_element_type=jnp.float32) + b1_ref[...]
    h = jnp.maximum(h, 0.0)
    if training:
        keep1 = jnp.bitwise_and(bits[:, : 8 * h1], jnp.uint32(1)) != 0
        h = jnp.where(keep1, h + h, 0.0)          # inverted dropout: keep * 2

    # ---- lin2 + ReLU (+ dropout p=0.5) ----
    h = jnp.dot(h.astype(w2_ref.dtype), w2_ref[...],
                preferred_element_type=jnp.float32) + b2_ref[...]
    h = jnp.maximum(h, 0.0)
    if training:
        keep2 = jnp.bitwise_and(bits[:, : 8 * h2], jnp.uint32(2)) != 0
        h = jnp.where(keep2, h + h, 0.0)

    # ---- lin3 (no activation) ----
    out = jnp.dot(h.astype(w3_ref.dtype), w3_ref[...],
                  preferred_element_type=jnp.float32) + b3_ref[...]
    o_ref[...] = out.astype(o_ref.dtype)


def discriminator_forward(x, params, *, training=False, rng=None,
                          row_tile=1024, compute_dtype=jnp.bfloat16):
    """x: (N, in_channels) float32.  params: w1,b1,w2,b2,w3,b3 (wK: (fan_in, fan_out))."""
    n, c_in = x.shape
    h1 = params["w1"].shape[1]
    h2 = params["w2"].shape[1]
    c_out = params["w3"].shape[1]

    G = 8                                    # row-group factor -> lane-dense I/O
    row_tile = min(row_tile, _round_up(n, 64))
    row_tile = _round_up(row_tile, 64)       # keep row_tile // G a multiple of 8
    n_pad = _round_up(n, row_tile)
    rg = row_tile // G

    if n_pad != n:
        x = jnp.pad(x, ((0, n_pad - n), (0, 0)))

    # Row-grouped, lane-dense input: (N, c_in) -> (N/G, G*c_in) (same bytes).
    xg = x.reshape(n_pad // G, G * c_in).astype(compute_dtype)

    # Block-diagonal weights: y_grouped = x_grouped @ kron(I_G, W) + tile(b, G).
    eye = jnp.eye(G, dtype=jnp.float32)
    w1g = jnp.kron(eye, params["w1"].astype(jnp.float32)).astype(compute_dtype)
    w2g = jnp.kron(eye, params["w2"].astype(jnp.float32)).astype(compute_dtype)
    w3g = jnp.kron(eye, params["w3"].astype(jnp.float32)).astype(compute_dtype)
    b1g = jnp.tile(params["b1"].astype(jnp.float32), G).reshape(1, G * h1)
    b2g = jnp.tile(params["b2"].astype(jnp.float32), G).reshape(1, G * h2)
    b3g = jnp.tile(params["b3"].astype(jnp.float32), G).reshape(1, G * c_out)

    kernel = functools.partial(_disc_kernel, training=training, h1=h1, h2=h2)

    inputs = []
    in_specs = []
    if training:
        # Dropout bits generated outside the kernel (portable: no pltpu.prng_*).
        hmax = max(h1, h2)
        if rng is None:
            rng = jax.random.PRNGKey(0)
        bits = jax.random.bits(rng, (n_pad // G, G * hmax), dtype=jnp.uint32)
        inputs.append(bits)
        in_specs.append(pl.BlockSpec((rg, G * hmax), lambda i: (i, 0)))

    inputs += [xg, w1g, b1g, w2g, b2g, w3g, b3g]
    in_specs += [
        pl.BlockSpec((rg, G * c_in),      lambda i: (i, 0)),   # x tile (streams)
        pl.BlockSpec((G * c_in, G * h1),  lambda i: (0, 0)),   # w1 (resident)
        pl.BlockSpec((1, G * h1),         lambda i: (0, 0)),   # b1
        pl.BlockSpec((G * h1, G * h2),    lambda i: (0, 0)),   # w2
        pl.BlockSpec((1, G * h2),         lambda i: (0, 0)),   # b2
        pl.BlockSpec((G * h2, G * c_out), lambda i: (0, 0)),   # w3
        pl.BlockSpec((1, G * c_out),      lambda i: (0, 0)),   # b3
    ]

    out = pl.pallas_call(
        kernel,
        out_shape=jax.ShapeDtypeStruct((n_pad // G, G * c_out), jnp.float32),
        grid=(n_pad // row_tile,),
        in_specs=in_specs,
        out_specs=pl.BlockSpec((rg, G * c_out), lambda i: (i, 0)),
        compiler_params=pltpu.CompilerParams(
            dimension_semantics=("parallel",)),   # no cross-step state, even w/ dropout
    )(*inputs)

    # Un-group rows (free reshape) and drop row padding.
    return out.reshape(n_pad, c_out)[:n]


def init_params(key, in_channels, hidden1, hidden2, out_channels):
    """torch.nn.Linear-style init (uniform +/- 1/sqrt(fan_in)); weights stored
    as (in_features, out_features), i.e. transposed vs. torch."""
    def linear(k, fan_in, fan_out):
        kw, kb = jax.random.split(k)
        bound = 1.0 / jnp.sqrt(fan_in)
        w = jax.random.uniform(kw, (fan_in, fan_out), jnp.float32, -bound, bound)
        b = jax.random.uniform(kb, (fan_out,), jnp.float32, -bound, bound)
        return w, b

    k1, k2, k3 = jax.random.split(key, 3)
    w1, b1 = linear(k1, in_channels, hidden1)
    w2, b2 = linear(k2, hidden1, hidden2)
    w3, b3 = linear(k3, hidden2, out_channels)
    return {"w1": w1, "b1": b1, "w2": w2, "b2": b2, "w3": w3, "b3": b3}


def reference_forward(x, params, compute_dtype=jnp.bfloat16):
    """Plain-JAX reference (eval mode), same compute precision as the kernel."""
    cd = compute_dtype
    h = jnp.dot(x.astype(cd), params["w1"].astype(cd),
                preferred_element_type=jnp.float32) + params["b1"]
    h = jnp.maximum(h, 0.0)
    h = jnp.dot(h.astype(cd), params["w2"].astype(cd),
                preferred_element_type=jnp.float32) + params["b2"]
    h = jnp.maximum(h, 0.0)
    return jnp.dot(h.astype(cd), params["w3"].astype(cd),
                   preferred_element_type=jnp.float32) + params["b3"]


if __name__ == "__main__":
    key = jax.random.PRNGKey(0)
    kx, kp = jax.random.split(key)

    # Small shapes consistent with the module: N samples x in_channels features.
    N, C_IN, H1, H2, C_OUT = 256, 32, 64, 32, 16
    x = jax.random.normal(kx, (N, C_IN), dtype=jnp.float32)
    params = init_params(kp, C_IN, H1, H2, C_OUT)

    # Eval mode (dropout = identity): deterministic, checked against reference.
    out = discriminator_forward(x, params, training=False)
    out = jax.block_until_ready(out)
    ref = reference_forward(x, params)
    assert out.shape == (N, C_OUT)
    assert jnp.allclose(out, ref, atol=1e-2, rtol=1e-2), "mismatch vs reference"

    # Training mode (dropout p=0.5, bits streamed into the kernel): just run it.
    out_train = discriminator_forward(x, params, training=True,
                                      rng=jax.random.PRNGKey(123))
    out_train = jax.block_until_ready(out_train)
    assert out_train.shape == (N, C_OUT)
    assert bool(jnp.all(jnp.isfinite(out_train)))

    print("KERNEL_OK")
</pallas_src>

<mosaic_0001>
module attributes {stable_mosaic.version = 11 : i64} {
  func.func @_disc_kernel(%arg0: i32, %arg1: memref<32x256xbf16, #tpu.memory_space<vmem>>, %arg2: memref<256x512xbf16, #tpu.memory_space<vmem>>, %arg3: memref<1x512xf32, #tpu.memory_space<vmem>>, %arg4: memref<512x256xbf16, #tpu.memory_space<vmem>>, %arg5: memref<1x256xf32, #tpu.memory_space<vmem>>, %arg6: memref<256x128xbf16, #tpu.memory_space<vmem>>, %arg7: memref<1x128xf32, #tpu.memory_space<vmem>>, %arg8: memref<32x128xf32, #tpu.memory_space<vmem>>) attributes {dimension_semantics = [#tpu.dimension_semantics<parallel>], iteration_bounds = array<i64: 1>, scalar_prefetch = 0 : i64, scratch_operands = 0 : i64, tpu.core_type = #tpu.core_type<tc>, window_params = [{transform_indices = @transform_0, window_bounds = array<i64: 32, 256>}, {pipeline_mode = #tpu.pipeline_mode<synchronous>, transform_indices = @transform_1, window_bounds = array<i64: 256, 512>}, {pipeline_mode = #tpu.pipeline_mode<synchronous>, transform_indices = @transform_2, window_bounds = array<i64: 1, 512>}, {pipeline_mode = #tpu.pipeline_mode<synchronous>, transform_indices = @transform_3, window_bounds = array<i64: 512, 256>}, {pipeline_mode = #tpu.pipeline_mode<synchronous>, transform_indices = @transform_4, window_bounds = array<i64: 1, 256>}, {pipeline_mode = #tpu.pipeline_mode<synchronous>, transform_indices = @transform_5, window_bounds = array<i64: 256, 128>}, {pipeline_mode = #tpu.pipeline_mode<synchronous>, transform_indices = @transform_6, window_bounds = array<i64: 1, 128>}, {transform_indices = @transform_7, window_bounds = array<i64: 32, 128>}]} {
    %c0 = arith.constant 0 : index
    %c0_0 = arith.constant 0 : index
    %0 = vector.load %arg1[%c0, %c0_0] : memref<32x256xbf16, #tpu.memory_space<vmem>>, vector<32x256xbf16>
    %c0_1 = arith.constant 0 : index
    %c0_2 = arith.constant 0 : index
    %1 = vector.load %arg2[%c0_1, %c0_2] : memref<256x512xbf16, #tpu.memory_space<vmem>>, vector<256x512xbf16>
    %cst = arith.constant dense<0.000000e+00> : vector<32x512xf32>
    %2 = tpu.matmul %0, %1, %cst {dimension_numbers = #tpu.dot_dimension_numbers<[1], [0], [0], [1], [0, 0, 1, 1], [], []>} : vector<32x256xbf16>, vector<256x512xbf16>, vector<32x512xf32> -> vector<32x512xf32>
    %c0_3 = arith.constant 0 : index
    %c0_4 = arith.constant 0 : index
    %3 = vector.load %arg3[%c0_3, %c0_4] : memref<1x512xf32, #tpu.memory_space<vmem>>, vector<1x512xf32>
    %4 = vector.broadcast %3 : vector<1x512xf32> to vector<32x512xf32>
    %5 = arith.addf %2, %4 : vector<32x512xf32>
    %cst_5 = arith.constant 0.000000e+00 : f32
    %6 = vector.broadcast %cst_5 : f32 to vector<32x512xf32>
    %7 = arith.maximumf %5, %6 : vector<32x512xf32>
    %8 = arith.truncf %7 : vector<32x512xf32> to vector<32x512xbf16>
    %c0_6 = arith.constant 0 : index
    %c0_7 = arith.constant 0 : index
    %9 = vector.load %arg4[%c0_6, %c0_7] : memref<512x256xbf16, #tpu.memory_space<vmem>>, vector<512x256xbf16>
    %cst_8 = arith.constant dense<0.000000e+00> : vector<32x256xf32>
    %10 = tpu.matmul %8, %9, %cst_8 {dimension_numbers = #tpu.dot_dimension_numbers<[1], [0], [0], [1], [0, 0, 1, 1], [], []>} : vector<32x512xbf16>, vector<512x256xbf16>, vector<32x256xf32> -> vector<32x256xf32>
    %c0_9 = arith.constant 0 : index
    %c0_10 = arith.constant 0 : index
    %11 = vector.load %arg5[%c0_9, %c0_10] : memref<1x256xf32, #tpu.memory_space<vmem>>, vector<1x256xf32>
    %12 = vector.broadcast %11 : vector<1x256xf32> to vector<32x256xf32>
    %13 = arith.addf %10, %12 : vector<32x256xf32>
    %cst_11 = arith.constant 0.000000e+00 : f32
    %14 = vector.broadcast %cst_11 : f32 to vector<32x256xf32>
    %15 = arith.maximumf %13, %14 : vector<32x256xf32>
    %16 = arith.truncf %15 : vector<32x256xf32> to vector<32x256xbf16>
    %c0_12 = arith.constant 0 : index
    %c0_13 = arith.constant 0 : index
    %17 = vector.load %arg6[%c0_12, %c0_13] : memref<256x128xbf16, #tpu.memory_space<vmem>>, vector<256x128xbf16>
    %cst_14 = arith.constant dense<0.000000e+00> : vector<32x128xf32>
    %18 = tpu.matmul %16, %17, %cst_14 {dimension_numbers = #tpu.dot_dimension_numbers<[1], [0], [0], [1], [0, 0, 1, 1], [], []>} : vector<32x256xbf16>, vector<256x128xbf16>, vector<32x128xf32> -> vector<32x128xf32>
    %c0_15 = arith.constant 0 : index
    %c0_16 = arith.constant 0 : index
    %19 = vector.load %arg7[%c0_15, %c0_16] : memref<1x128xf32, #tpu.memory_space<vmem>>, vector<1x128xf32>
    %20 = vector.broadcast %19 : vector<1x128xf32> to vector<32x128xf32>
    %21 = arith.addf %18, %20 : vector<32x128xf32>
    %c0_17 = arith.constant 0 : index
    %c0_18 = arith.constant 0 : index
    %22 = vector.load %arg8[%c0_17, %c0_18] : memref<32x128xf32, #tpu.memory_space<vmem>>, vector<32x128xf32>
    tpu.vector_store %arg8[%c0_17, %c0_18], %21 {strides = array<i32>} : memref<32x128xf32, #tpu.memory_space<vmem>>, vector<32x128xf32>,
    return
  }
  func.func @transform_0(%arg0: i32) -> (i32, i32) {
    %c0_i32 = arith.constant 0 : i32
    %c0_i32_0 = arith.constant 0 : i32
    return %arg0, %c0_i32 : i32, i32
  }
  func.func @transform_1(%arg0: i32) -> (i32, i32) {
    %c0_i32 = arith.constant 0 : i32
    %c0_i32_0 = arith.constant 0 : i32
    %c0_i32_1 = arith.constant 0 : i32
    return %c0_i32, %c0_i32_0 : i32, i32
  }
  func.func @transform_2(%arg0: i32) -> (i32, i32) {
    %c0_i32 = arith.constant 0 : i32
    %c0_i32_0 = arith.constant 0 : i32
    %c0_i32_1 = arith.constant 0 : i32
    return %c0_i32, %c0_i32_0 : i32, i32
  }
  func.func @transform_3(%arg0: i32) -> (i32, i32) {
    %c0_i32 = arith.constant 0 : i32
    %c0_i32_0 = arith.constant 0 : i32
    %c0_i32_1 = arith.constant 0 : i32
    return %c0_i32, %c0_i32_0 : i32, i32
  }
  func.func @transform_4(%arg0: i32) -> (i32, i32) {
    %c0_i32 = arith.constant 0 : i32
    %c0_i32_0 = arith.constant 0 : i32
    %c0_i32_1 = arith.constant 0 : i32
    return %c0_i32, %c0_i32_0 : i32, i32
  }
  func.func @transform_5(%arg0: i32) -> (i32, i32) {
    %c0_i32 = arith.constant 0 : i32
    %c0_i32_0 = arith.constant 0 : i32
    %c0_i32_1 = arith.constant 0 : i32
    return %c0_i32, %c0_i32_0 : i32, i32
  }
  func.func @transform_6(%arg0: i32) -> (i32, i32) {
    %c0_i32 = arith.constant 0 : i32
    %c0_i32_0 = arith.constant 0 : i32
    %c0_i32_1 = arith.constant 0 : i32
    return %c0_i32, %c0_i32_0 : i32, i32
  }
  func.func @transform_7(%arg0: i32) -> (i32, i32) {
    %c0_i32 = arith.constant 0 : i32
    %c0_i32_0 = arith.constant 0 : i32
    return %arg0, %c0_i32 : i32, i32
  }
}

</mosaic_0001>

<llo_original>
// kernel: tpu_custom_call.1
$region0: #{tpu_custom_call.1}
  #allocation0 [shape = 'u32[]', space=smem, size = 0x4, offset = 0x4, fixed_abs, tag = 'smem constant byte address 0x4 - core index']
  #allocation1 [shape = 'u32[144,128]{1,0:T(1,128)}', space=vmem, size = 0x12000, scoped, tag = 'internal scratch']
  %s0 = inlined_call_operand.hbm [shape: bf16[32,256], index: 0, kind: input, shape index: {}]
  %s1 = inlined_call_operand.hbm [shape: bf16[256,512], index: 1, kind: input, shape index: {}]
  %s2 = inlined_call_operand.vmem [shape: f32[1,512], index: 2, kind: input, shape index: {}]
  %s3 = inlined_call_operand.hbm [shape: bf16[512,256], index: 3, kind: input, shape index: {}]
  %s4 = inlined_call_operand.vmem [shape: f32[1,256], index: 4, kind: input, shape index: {}]
  %s5 = inlined_call_operand.hbm [shape: bf16[256,128], index: 5, kind: input, shape index: {}]
  %s6 = inlined_call_operand.vmem [shape: f32[1,128], index: 6, kind: input, shape index: {}]
  %s7 = inlined_call_operand.hbm [shape: f32[32,128], index: 7, kind: output, shape index: {}]
  %s8 = sld [smem:[#allocation0]]
  $region54: #{tpu_custom_call.1} parent=0
    _
  %s10 = ssub.s32 1, %s8
  %s11 = scalar_select 0, %s10, %s8
  $region1: #{tpu_custom_call.1} parent=0
    #allocation2 [shape = 'u8[16384]{0}', space=vmem, size = 0x4000, scoped, tag = 'input window, operand 0, single buffered']
    #allocation3 [shape = 's32[1]{0}', space=sflag, size = 0x4, scoped, tag = 'scoped memory for tpu_custom_call.1']
    #allocation4 [shape = 's32[1]{0}', space=sflag, size = 0x4, scoped, tag = 'scoped memory for tpu_custom_call.1']
    #allocation5 [shape = 'u8[262144]{0}', space=vmem, size = 0x40000, scoped, tag = 'input window, operand 1, single buffered']
    #allocation6 [shape = 's32[1]{0}', space=sflag, size = 0x4, scoped, tag = 'scoped memory for tpu_custom_call.1']
    #allocation7 [shape = 'u8[262144]{0}', space=vmem, size = 0x40000, scoped, tag = 'input window, operand 3, single buffered']
    #allocation8 [shape = 'u8[65536]{0}', space=vmem, size = 0x10000, scoped, tag = 'input window, operand 5, single buffered']
    #allocation9 [shape = 's32[1]{0}', space=sflag, size = 0x4, scoped, tag = 'scoped memory for tpu_custom_call.1']
    #allocation10 [shape = 'u8[16384]{0}', space=vmem, size = 0x4000, scoped, tag = 'output window, operand 0, single buffered']
    %12 = vsyncpa [#allocation3], 0
    %13 = vsyncpa [#allocation6], 0
    %14 = vsyncpa [#allocation9], 0
    %15 = vsyncpa [#allocation4], 0
    // Predicated region
    $region2: #{tpu_custom_call.1} parent=1 // pred_check
      _
    $region3: #{tpu_custom_call.1} parent=1 // pred_check_branch
      %17 = sbr.rel (0) target = $region5
    $region4: #{tpu_custom_call.1} parent=1 // pred_region
      %s19 = ssub.s32 512, 512
      %20 = vsyncadd [#allocation3], %s19
      %s21 = sshll.u32 [#allocation2], 4
      %s22 = int_to_ptr.vmem [resolvable:$true] %s21
      %27 = dma.hbm_to_vmem [thread:$0]  %s0, 512, %s22, [#allocation3], 128, 128, 8
    $region5: #{tpu_custom_call.1} parent=1 // pred_fallthru
      _
    // Predicated region
    $region6: #{tpu_custom_call.1} parent=1 // pred_check
      _
    $region7: #{tpu_custom_call.1} parent=1 // pred_check_branch
      %29 = sbr.rel (0) target = $region9
    $region8: #{tpu_custom_call.1} parent=1 // pred_region
      %s31 = ssub.s32 8192, 8192
      %32 = vsyncadd [#allocation6], %s31
      %s33 = sshll.u32 [#allocation5], 4
      %s34 = int_to_ptr.vmem [resolvable:$true] %s33
      %39 = dma.hbm_to_vmem [thread:$0]  %s1, 8192, %s34, [#allocation6], 256, 256, 16
    $region9: #{tpu_custom_call.1} parent=1 // pred_fallthru
      _
    // Predicated region
    $region10: #{tpu_custom_call.1} parent=1 // pred_check
      _
    $region11: #{tpu_custom_call.1} parent=1 // pred_check_branch
      %41 = sbr.rel (0) target = $region13
    $region12: #{tpu_custom_call.1} parent=1 // pred_region
      _
    $region13: #{tpu_custom_call.1} parent=1 // pred_fallthru
      _
    // Predicated region
    $region14: #{tpu_custom_call.1} parent=1 // pred_check
      _
    $region15: #{tpu_custom_call.1} parent=1 // pred_check_branch
      %43 = sbr.rel (0) target = $region17
    $region16: #{tpu_custom_call.1} parent=1 // pred_region
      %s45 = ssub.s32 8192, 8192
      %46 = vsyncadd [#allocation6], %s45
      %s47 = sshll.u32 [#allocation7], 4
      %s48 = int_to_ptr.vmem [resolvable:$true] %s47
      %53 = dma.hbm_to_vmem [thread:$0]  %s3, 8192, %s48, [#allocation6], 128, 128, 8
    $region17: #{tpu_custom_call.1} parent=1 // pred_fallthru
      _
    // Predicated region
    $region18: #{tpu_custom_call.1} parent=1 // pred_check
      _
    $region19: #{tpu_custom_call.1} parent=1 // pred_check_branch
      %55 = sbr.rel (0) target = $region21
    $region20: #{tpu_custom_call.1} parent=1 // pred_region
      _
    $region21: #{tpu_custom_call.1} parent=1 // pred_fallthru
      _
    // Predicated region
    $region22: #{tpu_custom_call.1} parent=1 // pred_check
      _
    $region23: #{tpu_custom_call.1} parent=1 // pred_check_branch
      %57 = sbr.rel (0) target = $region25
    $region24: #{tpu_custom_call.1} parent=1 // pred_region
      %s59 = ssub.s32 2048, 2048
      %60 = vsyncadd [#allocation9], %s59
      %s61 = sshll.u32 [#allocation8], 4
      %s62 = int_to_ptr.vmem [resolvable:$true] %s61
      %67 = dma.hbm_to_vmem [thread:$0]  %s5, 2048, %s62, [#allocation9], 64, 64, 4
    $region25: #{tpu_custom_call.1} parent=1 // pred_fallthru
      _
    // Predicated region
    $region26: #{tpu_custom_call.1} parent=1 // pred_check
      _
    $region27: #{tpu_custom_call.1} parent=1 // pred_check_branch
      %69 = sbr.rel (0) target = $region29
    $region28: #{tpu_custom_call.1} parent=1 // pred_region
      _
    $region29: #{tpu_custom_call.1} parent=1 // pred_fallthru
      _
    // Predicated region
    $region30: #{tpu_custom_call.1} parent=1 // pred_check
      _
    $region31: #{tpu_custom_call.1} parent=1 // pred_check_branch
      %71 = sbr.rel (0) target = $region33
    $region32: #{tpu_custom_call.1} parent=1 // pred_region
      %72 = dma.done [#allocation3], 512
    $region33: #{tpu_custom_call.1} parent=1 // pred_fallthru
      _
    // Predicated region
    $region34: #{tpu_custom_call.1} parent=1 // pred_check
      _
    $region35: #{tpu_custom_call.1} parent=1 // pred_check_branch
      %74 = sbr.rel (0) target = $region37
    $region36: #{tpu_custom_call.1} parent=1 // pred_region
      %75 = dma.done [#allocation6], 8192
    $region37: #{tpu_custom_call.1} parent=1 // pred_fallthru
      _
    // Predicated region
    $region38: #{tpu_custom_call.1} parent=1 // pred_check
      _
    $region39: #{tpu_custom_call.1} parent=1 // pred_check_branch
      %77 = sbr.rel (0) target = $region41
    $region40: #{tpu_custom_call.1} parent=1 // pred_region
      %78 = dma.done [#allocation6], 8192
    $region41: #{tpu_custom_call.1} parent=1 // pred_fallthru
      _
    // Predicated region
    $region42: #{tpu_custom_call.1} parent=1 // pred_check
      _
    $region43: #{tpu_custom_call.1} parent=1 // pred_check_branch
      %80 = sbr.rel (0) target = $region45
    $region44: #{tpu_custom_call.1} parent=1 // pred_region
      %81 = dma.done [#allocation9], 2048
    $region45: #{tpu_custom_call.1} parent=1 // pred_fallthru
      _
    %v83 = vld [vmem:[#allocation2] sm:$0xff]
    %v84 = vld [vmem:[#allocation2 + $0x8] sm:$0xff]
    %v85 = vld [vmem:[#allocation2 + $0x10] sm:$0xff]
    %v86 = vld [vmem:[#allocation2 + $0x18] sm:$0xff]
    %v87 = vld [vmem:[#allocation5] sm:$0xff]
    %v88 = vld [vmem:[#allocation5 + $0x8] sm:$0xff]
    %v89 = vld [vmem:[#allocation5 + $0x10] sm:$0xff]
    %v90 = vld [vmem:[#allocation5 + $0x18] sm:$0xff]
    %v91 = vld [vmem:[#allocation5 + $0x20] sm:$0xff]
    %v92 = vld [vmem:[#allocation5 + $0x28] sm:$0xff]
    %v93 = vld [vmem:[#allocation5 + $0x30] sm:$0xff]
    %v94 = vld [vmem:[#allocation5 + $0x38] sm:$0xff]
    %v95 = vld [vmem:[#allocation5 + $0x40] sm:$0xff]
    %v96 = vld [vmem:[#allocation5 + $0x48] sm:$0xff]
    %v97 = vld [vmem:[#allocation5 + $0x50] sm:$0xff]
    %v98 = vld [vmem:[#allocation5 + $0x58] sm:$0xff]
    %v99 = vld [vmem:[#allocation5 + $0x60] sm:$0xff]
    %v100 = vld [vmem:[#allocation5 + $0x68] sm:$0xff]
    %v101 = vld [vmem:[#allocation5 + $0x70] sm:$0xff]
    %v102 = vld [vmem:[#allocation5 + $0x78] sm:$0xff]
    %v103 = vld [vmem:[#allocation5 + $0x80] sm:$0xff]
    %v104 = vld [vmem:[#allocation5 + $0x88] sm:$0xff]
    %v105 = vld [vmem:[#allocation5 + $0x90] sm:$0xff]
    %v106 = vld [vmem:[#allocation5 + $0x98] sm:$0xff]
    %v107 = vld [vmem:[#allocation5 + $0xa0] sm:$0xff]
    %v108 = vld [vmem:[#allocation5 + $0xa8] sm:$0xff]
    %v109 = vld [vmem:[#allocation5 + $0xb0] sm:$0xff]
    %v110 = vld [vmem:[#allocation5 + $0xb8] sm:$0xff]
    %v111 = vld [vmem:[#allocation5 + $0xc0] sm:$0xff]
    %v112 = vld [vmem:[#allocation5 + $0xc8] sm:$0xff]
    %v113 = vld [vmem:[#allocation5 + $0xd0] sm:$0xff]
    %v114 = vld [vmem:[#allocation5 + $0xd8] sm:$0xff]
    %v115 = vld [vmem:[#allocation5 + $0xe0] sm:$0xff]
    %v116 = vld [vmem:[#allocation5 + $0xe8] sm:$0xff]
    %v117 = vld [vmem:[#allocation5 + $0xf0] sm:$0xff]
    %v118 = vld [vmem:[#allocation5 + $0xf8] sm:$0xff]
    %v119 = vld [vmem:[#allocation5 + $0x100] sm:$0xff]
    %v120 = vld [vmem:[#allocation5 + $0x108] sm:$0xff]
    %v121 = vld [vmem:[#allocation5 + $0x110] sm:$0xff]
    %v122 = vld [vmem:[#allocation5 + $0x118] sm:$0xff]
    %v123 = vld [vmem:[#allocation5 + $0x120] sm:$0xff]
    %v124 = vld [vmem:[#allocation5 + $0x128] sm:$0xff]
    %v125 = vld [vmem:[#allocation5 + $0x130] sm:$0xff]
    %v126 = vld [vmem:[#allocation5 + $0x138] sm:$0xff]
    %v127 = vld [vmem:[#allocation5 + $0x140] sm:$0xff]
    %v128 = vld [vmem:[#allocation5 + $0x148] sm:$0xff]
    %v129 = vld [vmem:[#allocation5 + $0x150] sm:$0xff]
    %v130 = vld [vmem:[#allocation5 + $0x158] sm:$0xff]
    %v131 = vld [vmem:[#allocation5 + $0x160] sm:$0xff]
    %v132 = vld [vmem:[#allocation5 + $0x168] sm:$0xff]
    %v133 = vld [vmem:[#allocation5 + $0x170] sm:$0xff]
    %v134 = vld [vmem:[#allocation5 + $0x178] sm:$0xff]
    %v135 = vld [vmem:[#allocation5 + $0x180] sm:$0xff]
    %v136 = vld [vmem:[#allocation5 + $0x188] sm:$0xff]
    %v137 = vld [vmem:[#allocation5 + $0x190] sm:$0xff]
    %v138 = vld [vmem:[#allocation5 + $0x198] sm:$0xff]
    %v139 = vld [vmem:[#allocation5 + $0x1a0] sm:$0xff]
    %v140 = vld [vmem:[#allocation5 + $0x1a8] sm:$0xff]
    %v141 = vld [vmem:[#allocation5 + $0x1b0] sm:$0xff]
    %v142 = vld [vmem:[#allocation5 + $0x1b8] sm:$0xff]
    %v143 = vld [vmem:[#allocation5 + $0x1c0] sm:$0xff]
    %v144 = vld [vmem:[#allocation5 + $0x1c8] sm:$0xff]
    %v145 = vld [vmem:[#allocation5 + $0x1d0] sm:$0xff]
    %v146 = vld [vmem:[#allocation5 + $0x1d8] sm:$0xff]
    %v147 = vld [vmem:[#allocation5 + $0x1e0] sm:$0xff]
    %v148 = vld [vmem:[#allocation5 + $0x1e8] sm:$0xff]
    %v149 = vld [vmem:[#allocation5 + $0x1f0] sm:$0xff]
    %v150 = vld [vmem:[#allocation5 + $0x1f8] sm:$0xff]
    %v151 = vld [vmem:[%s2] sm:$0xf]
    %v153 = vlaneseq
    %v154 = vshrl.u32 %v153, 7
    %v155 = vsub.s32 0, %v154
    %v156 = vrot.slane %v151, %v155
    %v157 = vlaneseq
    %v158 = vshrl.u32 %v157, 7
    %v159 = vsub.s32 1, %v158
    %v160 = vrot.slane %v151, %v159
    %v161 = vlaneseq
    %v162 = vshrl.u32 %v161, 7
    %v163 = vsub.s32 2, %v162
    %v164 = vrot.slane %v151, %v163
    %v165 = vlaneseq
    %v166 = vshrl.u32 %v165, 7
    %v167 = vsub.s32 3, %v166
    %v168 = vrot.slane %v151, %v167
    %v177 = vunpack.c.l.b16 %v83
    %v178 = vunpack.c.h.b16 %v83
    %v179 = vunpack.c.l.b16 %v84
    %v180 = vunpack.c.h.b16 %v84
    %v181 = vunpack.c.l.b16 %v85
    %v182 = vunpack.c.h.b16 %v85
    %v183 = vunpack.c.l.b16 %v86
    %v184 = vunpack.c.h.b16 %v86
    %v185 = vpack.c.b16 %v179, %v177
    %v186 = vpack.c.b16 %v180, %v178
    %v187 = vpack.c.b16 %v183, %v181
    %v188 = vpack.c.b16 %v184, %v182
    %v257 = vunpack.c.l.b16 %v87
    %v258 = vunpack.c.h.b16 %v87
    %v259 = vunpack.c.l.b16 %v88
    %v260 = vunpack.c.h.b16 %v88
    %v261 = vunpack.c.l.b16 %v89
    %v262 = vunpack.c.h.b16 %v89
    %v263 = vunpack.c.l.b16 %v90
    %v264 = vunpack.c.h.b16 %v90
    %v265 = vunpack.c.l.b16 %v91
    %v266 = vunpack.c.h.b16 %v91
    %v267 = vunpack.c.l.b16 %v92
    %v268 = vunpack.c.h.b16 %v92
    %v269 = vunpack.c.l.b16 %v93
    %v270 = vunpack.c.h.b16 %v93
    %v271 = vunpack.c.l.b16 %v94
    %v272 = vunpack.c.h.b16 %v94
    %v273 = vunpack.c.l.b16 %v95
    %v274 = vunpack.c.h.b16 %v95
    %v275 = vunpack.c.l.b16 %v96
    %v276 = vunpack.c.h.b16 %v96
    %v277 = vunpack.c.l.b16 %v97
    %v278 = vunpack.c.h.b16 %v97
    %v279 = vunpack.c.l.b16 %v98
    %v280 = vunpack.c.h.b16 %v98
    %v281 = vunpack.c.l.b16 %v99
    %v282 = vunpack.c.h.b16 %v99
    %v283 = vunpack.c.l.b16 %v100
    %v284 = vunpack.c.h.b16 %v100
    %v285 = vunpack.c.l.b16 %v101
    %v286 = vunpack.c.h.b16 %v101
    %v287 = vunpack.c.l.b16 %v102
    %v288 = vunpack.c.h.b16 %v102
    %v289 = vunpack.c.l.b16 %v103
    %v290 = vunpack.c.h.b16 %v103
    %v291 = vunpack.c.l.b16 %v104
    %v292 = vunpack.c.h.b16 %v104
    %v293 = vunpack.c.l.b16 %v105
    %v294 = vunpack.c.h.b16 %v105
    %v295 = vunpack.c.l.b16 %v106
    %v296 = vunpack.c.h.b16 %v106
    %v297 = vunpack.c.l.b16 %v107
    %v298 = vunpack.c.h.b16 %v107
    %v299 = vunpack.c.l.b16 %v108
    %v300 = vunpack.c.h.b16 %v108
    %v301 = vunpack.c.l.b16 %v109
    %v302 = vunpack.c.h.b16 %v109
    %v303 = vunpack.c.l.b16 %v110
    %v304 = vunpack.c.h.b16 %v110
    %v305 = vunpack.c.l.b16 %v111
    %v306 = vunpack.c.h.b16 %v111
    %v307 = vunpack.c.l.b16 %v112
    %v308 = vunpack.c.h.b16 %v112
    %v309 = vunpack.c.l.b16 %v113
    %v310 = vunpack.c.h.b16 %v113
    %v311 = vunpack.c.l.b16 %v114
    %v312 = vunpack.c.h.b16 %v114
    %v313 = vunpack.c.l.b16 %v115
    %v314 = vunpack.c.h.b16 %v115
    %v315 = vunpack.c.l.b16 %v116
    %v316 = vunpack.c.h.b16 %v116
    %v317 = vunpack.c.l.b16 %v117
    %v318 = vunpack.c.h.b16 %v117
    %v319 = vunpack.c.l.b16 %v118
    %v320 = vunpack.c.h.b16 %v118
    %v321 = vunpack.c.l.b16 %v119
    %v322 = vunpack.c.h.b16 %v119
    %v323 = vunpack.c.l.b16 %v120
    %v324 = vunpack.c.h.b16 %v120
    %v325 = vunpack.c.l.b16 %v121
    %v326 = vunpack.c.h.b16 %v121
    %v327 = vunpack.c.l.b16 %v122
    %v328 = vunpack.c.h.b16 %v122
    %v329 = vunpack.c.l.b16 %v123
    %v330 = vunpack.c.h.b16 %v123
    %v331 = vunpack.c.l.b16 %v124
    %v332 = vunpack.c.h.b16 %v124
    %v333 = vunpack.c.l.b16 %v125
    %v334 = vunpack.c.h.b16 %v125
    %v335 = vunpack.c.l.b16 %v126
    %v336 = vunpack.c.h.b16 %v126
    %v337 = vunpack.c.l.b16 %v127
    %v338 = vunpack.c.h.b16 %v127
    %v339 = vunpack.c.l.b16 %v128
    %v340 = vunpack.c.h.b16 %v128
    %v341 = vunpack.c.l.b16 %v129
    %v342 = vunpack.c.h.b16 %v129
    %v343 = vunpack.c.l.b16 %v130
    %v344 = vunpack.c.h.b16 %v130
    %v345 = vunpack.c.l.b16 %v131
    %v346 = vunpack.c.h.b16 %v131
    %v347 = vunpack.c.l.b16 %v132
    %v348 = vunpack.c.h.b16 %v132
    %v349 = vunpack.c.l.b16 %v133
    %v350 = vunpack.c.h.b16 %v133
    %v351 = vunpack.c.l.b16 %v134
    %v352 = vunpack.c.h.b16 %v134
    %v353 = vunpack.c.l.b16 %v135
    %v354 = vunpack.c.h.b16 %v135
    %v355 = vunpack.c.l.b16 %v136
    %v356 = vunpack.c.h.b16 %v136
    %v357 = vunpack.c.l.b16 %v137
    %v358 = vunpack.c.h.b16 %v137
    %v359 = vunpack.c.l.b16 %v138
    %v360 = vunpack.c.h.b16 %v138
    %v361 = vunpack.c.l.b16 %v139
    %v362 = vunpack.c.h.b16 %v139
    %v363 = vunpack.c.l.b16 %v140
    %v364 = vunpack.c.h.b16 %v140
    %v365 = vunpack.c.l.b16 %v141
    %v366 = vunpack.c.h.b16 %v141
    %v367 = vunpack.c.l.b16 %v142
    %v368 = vunpack.c.h.b16 %v142
    %v369 = vunpack.c.l.b16 %v143
    %v370 = vunpack.c.h.b16 %v143
    %v371 = vunpack.c.l.b16 %v144
    %v372 = vunpack.c.h.b16 %v144
    %v373 = vunpack.c.l.b16 %v145
    %v374 = vunpack.c.h.b16 %v145
    %v375 = vunpack.c.l.b16 %v146
    %v376 = vunpack.c.h.b16 %v146
    %v377 = vunpack.c.l.b16 %v147
    %v378 = vunpack.c.h.b16 %v147
    %v379 = vunpack.c.l.b16 %v148
    %v380 = vunpack.c.h.b16 %v148
    %v381 = vunpack.c.l.b16 %v149
    %v382 = vunpack.c.h.b16 %v149
    %v383 = vunpack.c.l.b16 %v150
    %v384 = vunpack.c.h.b16 %v150
    %v385 = vpack.c.b16 %v261, %v257
    %v386 = vpack.c.b16 %v262, %v258
    %v387 = vpack.c.b16 %v263, %v259
    %v388 = vpack.c.b16 %v264, %v260
    %v389 = vpack.c.b16 %v269, %v265
    %v390 = vpack.c.b16 %v270, %v266
    %v391 = vpack.c.b16 %v271, %v267
    %v392 = vpack.c.b16 %v272, %v268
    %v393 = vpack.c.b16 %v277, %v273
    %v394 = vpack.c.b16 %v278, %v274
    %v395 = vpack.c.b16 %v279, %v275
    %v396 = vpack.c.b16 %v280, %v276
    %v397 = vpack.c.b16 %v285, %v281
    %v398 = vpack.c.b16 %v286, %v282
    %v399 = vpack.c.b16 %v287, %v283
    %v400 = vpack.c.b16 %v288, %v284
    %v401 = vpack.c.b16 %v293, %v289
    %v402 = vpack.c.b16 %v294, %v290
    %v403 = vpack.c.b16 %v295, %v291
    %v404 = vpack.c.b16 %v296, %v292
    %v405 = vpack.c.b16 %v301, %v297
    %v406 = vpack.c.b16 %v302, %v298
    %v407 = vpack.c.b16 %v303, %v299
    %v408 = vpack.c.b16 %v304, %v300
    %v409 = vpack.c.b16 %v309, %v305
    %v410 = vpack.c.b16 %v310, %v306
    %v411 = vpack.c.b16 %v311, %v307
    %v412 = vpack.c.b16 %v312, %v308
    %v413 = vpack.c.b16 %v317, %v313
    %v414 = vpack.c.b16 %v318, %v314
    %v415 = vpack.c.b16 %v319, %v315
    %v416 = vpack.c.b16 %v320, %v316
    %v417 = vpack.c.b16 %v325, %v321
    %v418 = vpack.c.b16 %v326, %v322
    %v419 = vpack.c.b16 %v327, %v323
    %v420 = vpack.c.b16 %v328, %v324
    %v421 = vpack.c.b16 %v333, %v329
    %v422 = vpack.c.b16 %v334, %v330
    %v423 = vpack.c.b16 %v335, %v331
    %v424 = vpack.c.b16 %v336, %v332
    %v425 = vpack.c.b16 %v341, %v337
    %v426 = vpack.c.b16 %v342, %v338
    %v427 = vpack.c.b16 %v343, %v339
    %v428 = vpack.c.b16 %v344, %v340
    %v429 = vpack.c.b16 %v349, %v345
    %v430 = vpack.c.b16 %v350, %v346
    %v431 = vpack.c.b16 %v351, %v347
    %v432 = vpack.c.b16 %v352, %v348
    %v433 = vpack.c.b16 %v357, %v353
    %v434 = vpack.c.b16 %v358, %v354
    %v435 = vpack.c.b16 %v359, %v355
    %v436 = vpack.c.b16 %v360, %v356
    %v437 = vpack.c.b16 %v365, %v361
    %v438 = vpack.c.b16 %v366, %v362
    %v439 = vpack.c.b16 %v367, %v363
    %v440 = vpack.c.b16 %v368, %v364
    %v441 = vpack.c.b16 %v373, %v369
    %v442 = vpack.c.b16 %v374, %v370
    %v443 = vpack.c.b16 %v375, %v371
    %v444 = vpack.c.b16 %v376, %v372
    %v445 = vpack.c.b16 %v381, %v377
    %v446 = vpack.c.b16 %v382, %v378
    %v447 = vpack.c.b16 %v383, %v379
    %v448 = vpack.c.b16 %v384, %v380
    %513 = vmatprep.subr.bf16.mxu0 %v386
    %514 = vmatpush1.bf16.msra.mxu0 %v385
    %515 = vmatprep.subr.bf16.mxu0 %v390
    %516 = vmatpush1.bf16.msra.mxu0 %v389
    %517 = vmatprep.subr.bf16.mxu0 %v394
    %518 = vmatpush1.bf16.msra.mxu0 %v393
    %519 = vmatprep.subr.bf16.mxu0 %v398
    %520 = vmatpush1.bf16.msra.mxu0 %v397
    %521 = vmatprep.subr.bf16.mxu0 %v402
    %522 = vmatpush1.bf16.msra.mxu0 %v401
    %523 = vmatprep.subr.bf16.mxu0 %v406
    %524 = vmatpush1.bf16.msra.mxu0 %v405
    %525 = vmatprep.subr.bf16.mxu0 %v410
    %526 = vmatpush1.bf16.msra.mxu0 %v409
    %527 = vmatprep.subr.bf16.mxu0 %v414
    %528 = vmatpush1.bf16.msra.mxu0 %v413
    %529 = vmatprep.subr.bf16.mxu0 %v418
    %530 = vmatpush1.bf16.msra.mxu0 %v417
    %531 = vmatprep.subr.bf16.mxu0 %v422
    %532 = vmatpush1.bf16.msra.mxu0 %v421
    %533 = vmatprep.subr.bf16.mxu0 %v426
    %534 = vmatpush1.bf16.msra.mxu0 %v425
    %535 = vmatprep.subr.bf16.mxu0 %v430
    %536 = vmatpush1.bf16.msra.mxu0 %v429
    %537 = vmatprep.subr.bf16.mxu0 %v434
    %538 = vmatpush1.bf16.msra.mxu0 %v433
    %539 = vmatprep.subr.bf16.mxu0 %v438
    %540 = vmatpush1.bf16.msra.mxu0 %v437
    %541 = vmatprep.subr.bf16.mxu0 %v442
    %542 = vmatpush1.bf16.msra.mxu0 %v441
    %543 = vmatprep.subr.bf16.mxu0 %v446
    %544 = vmatpush1.bf16.msra.mxu0 %v445
    %545 = vmatprep.mubr.bf16.mxu0 %v186
    %546 = vmatmul.mubr.bf16.gmra.mrb[0].mxu0 %v185
    %v547 = vpop.f32.mrb[0].mxu0
    %v548 = vadd.f32 %v156, %v547
    %v549 = vpop.f32.mrb[0].mxu0
    %v550 = vadd.f32 %v160, %v549
    %v551 = vpop.f32.mrb[0].mxu0
    %v552 = vadd.f32 %v156, %v551
    %v553 = vpop.f32.mrb[0].mxu0
    %v554 = vadd.f32 %v160, %v553
    %555 = vmatprep.mubr.bf16.mxu0 %v188
    %556 = vmatmul.mubr.bf16.gmra.mrb[0].mxu0 %v187
    %v557 = vpop.f32.mrb[0].mxu0
    %v558 = vadd.f32 %v156, %v557
    %v559 = vpop.f32.mrb[0].mxu0
    %v560 = vadd.f32 %v160, %v559
    %v561 = vpop.f32.mrb[0].mxu0
    %v562 = vadd.f32 %v156, %v561
    %v563 = vpop.f32.mrb[0].mxu0
    %v564 = vadd.f32 %v160, %v563
    %565 = vdwg.mxu0
    %566 = vmatprep.subr.bf16.mxu0 %v388
    %567 = vmatpush1.bf16.msra.mxu0 %v387
    %568 = vmatprep.subr.bf16.mxu0 %v392
    %569 = vmatpush1.bf16.msra.mxu0 %v391
    %570 = vmatprep.subr.bf16.mxu0 %v396
    %571 = vmatpush1.bf16.msra.mxu0 %v395
    %572 = vmatprep.subr.bf16.mxu0 %v400
    %573 = vmatpush1.bf16.msra.mxu0 %v399
    %574 = vmatprep.subr.bf16.mxu0 %v404
    %575 = vmatpush1.bf16.msra.mxu0 %v403
    %576 = vmatprep.subr.bf16.mxu0 %v408
    %577 = vmatpush1.bf16.msra.mxu0 %v407
    %578 = vmatprep.subr.bf16.mxu0 %v412
    %579 = vmatpush1.bf16.msra.mxu0 %v411
    %580 = vmatprep.subr.bf16.mxu0 %v416
    %581 = vmatpush1.bf16.msra.mxu0 %v415
    %582 = vmatprep.subr.bf16.mxu0 %v420
    %583 = vmatpush1.bf16.msra.mxu0 %v419
    %584 = vmatprep.subr.bf16.mxu0 %v424
    %585 = vmatpush1.bf16.msra.mxu0 %v423
    %586 = vmatprep.subr.bf16.mxu0 %v428
    %587 = vmatpush1.bf16.msra.mxu0 %v427
    %588 = vmatprep.subr.bf16.mxu0 %v432
    %589 = vmatpush1.bf16.msra.mxu0 %v431
    %590 = vmatprep.subr.bf16.mxu0 %v436
    %591 = vmatpush1.bf16.msra.mxu0 %v435
    %592 = vmatprep.subr.bf16.mxu0 %v440
    %593 = vmatpush1.bf16.msra.mxu0 %v439
    %594 = vmatprep.subr.bf16.mxu0 %v444
    %595 = vmatpush1.bf16.msra.mxu0 %v443
    %596 = vmatprep.subr.bf16.mxu0 %v448
    %597 = vmatpush1.bf16.msra.mxu0 %v447
    %598 = vmatprep.mubr.bf16.mxu0 %v186
    %599 = vmatmul.mubr.bf16.gmra.mrb[0].mxu0 %v185
    %v600 = vpop.f32.mrb[0].mxu0
    %v601 = vadd.f32 %v164, %v600
    %v602 = vpop.f32.mrb[0].mxu0
    %v603 = vadd.f32 %v168, %v602
    %v604 = vpop.f32.mrb[0].mxu0
    %v605 = vadd.f32 %v164, %v604
    %v606 = vpop.f32.mrb[0].mxu0
    %v607 = vadd.f32 %v168, %v606
    %608 = vmatprep.mubr.bf16.mxu0 %v188
    %609 = vmatmul.mubr.bf16.gmra.mrb[0].mxu0 %v187
    %v610 = vpop.f32.mrb[0].mxu0
    %v611 = vadd.f32 %v164, %v610
    %v612 = vpop.f32.mrb[0].mxu0
    %v613 = vadd.f32 %v168, %v612
    %v614 = vpop.f32.mrb[0].mxu0
    %v615 = vadd.f32 %v164, %v614
    %v616 = vpop.f32.mrb[0].mxu0
    %v617 = vadd.f32 %v168, %v616
    %618 = vdwg.mxu0
    %v619 = vmax.f32 %v548, 0.0
    %v620 = vmax.f32 %v550, 0.0
    %v621 = vmax.f32 %v601, 0.0
    %v622 = vmax.f32 %v603, 0.0
    %v623 = vmax.f32 %v552, 0.0
    %v624 = vmax.f32 %v554, 0.0
    %v625 = vmax.f32 %v605, 0.0
    %v626 = vmax.f32 %v607, 0.0
    %v627 = vmax.f32 %v558, 0.0
    %v628 = vmax.f32 %v560, 0.0
    %v629 = vmax.f32 %v611, 0.0
    %v630 = vmax.f32 %v613, 0.0
    %v631 = vmax.f32 %v562, 0.0
    %v632 = vmax.f32 %v564, 0.0
    %v633 = vmax.f32 %v615, 0.0
    %v634 = vmax.f32 %v617, 0.0
    %v635 = vpack.c.bf16 %v623, %v619
    %v636 = vpack.c.bf16 %v624, %v620
    %v637 = vpack.c.bf16 %v625, %v621
    %v638 = vpack.c.bf16 %v626, %v622
    %v639 = vpack.c.bf16 %v631, %v627
    %v640 = vpack.c.bf16 %v632, %v628
    %v641 = vpack.c.bf16 %v633, %v629
    %v642 = vpack.c.bf16 %v634, %v630
    %v643 = vld [vmem:[#allocation7] sm:$0xff]
    %v644 = vld [vmem:[#allocation7 + $0x8] sm:$0xff]
    %v645 = vld [vmem:[#allocation7 + $0x10] sm:$0xff]
    %v646 = vld [vmem:[#allocation7 + $0x18] sm:$0xff]
    %v647 = vld [vmem:[#allocation7 + $0x20] sm:$0xff]
    %v648 = vld [vmem:[#allocation7 + $0x28] sm:$0xff]
    %v649 = vld [vmem:[#allocation7 + $0x30] sm:$0xff]
    %v650 = vld [vmem:[#allocation7 + $0x38] sm:$0xff]
    %v651 = vld [vmem:[#allocation7 + $0x40] sm:$0xff]
    %v652 = vld [vmem:[#allocation7 + $0x48] sm:$0xff]
    %v653 = vld [vmem:[#allocation7 + $0x50] sm:$0xff]
    %v654 = vld [vmem:[#allocation7 + $0x58] sm:$0xff]
    %v655 = vld [vmem:[#allocation7 + $0x60] sm:$0xff]
    %v656 = vld [vmem:[#allocation7 + $0x68] sm:$0xff]
    %v657 = vld [vmem:[#allocation7 + $0x70] sm:$0xff]
    %v658 = vld [vmem:[#allocation7 + $0x78] sm:$0xff]
    %v659 = vld [vmem:[#allocation7 + $0x80] sm:$0xff]
    %v660 = vld [vmem:[#allocation7 + $0x88] sm:$0xff]
    %v661 = vld [vmem:[#allocation7 + $0x90] sm:$0xff]
    %v662 = vld [vmem:[#allocation7 + $0x98] sm:$0xff]
    %v663 = vld [vmem:[#allocation7 + $0xa0] sm:$0xff]
    %v664 = vld [vmem:[#allocation7 + $0xa8] sm:$0xff]
    %v665 = vld [vmem:[#allocation7 + $0xb0] sm:$0xff]
    %v666 = vld [vmem:[#allocation7 + $0xb8] sm:$0xff]
    %v667 = vld [vmem:[#allocation7 + $0xc0] sm:$0xff]
    %v668 = vld [vmem:[#allocation7 + $0xc8] sm:$0xff]
    %v669 = vld [vmem:[#allocation7 + $0xd0] sm:$0xff]
    %v670 = vld [vmem:[#allocation7 + $0xd8] sm:$0xff]
    %v671 = vld [vmem:[#allocation7 + $0xe0] sm:$0xff]
    %v672 = vld [vmem:[#allocation7 + $0xe8] sm:$0xff]
    %v673 = vld [vmem:[#allocation7 + $0xf0] sm:$0xff]
    %v674 = vld [vmem:[#allocation7 + $0xf8] sm:$0xff]
    %v675 = vld [vmem:[#allocation7 + $0x100] sm:$0xff]
    %v676 = vld [vmem:[#allocation7 + $0x108] sm:$0xff]
    %v677 = vld [vmem:[#allocation7 + $0x110] sm:$0xff]
    %v678 = vld [vmem:[#allocation7 + $0x118] sm:$0xff]
    %v679 = vld [vmem:[#allocation7 + $0x120] sm:$0xff]
    %v680 = vld [vmem:[#allocation7 + $0x128] sm:$0xff]
    %v681 = vld [vmem:[#allocation7 + $0x130] sm:$0xff]
    %v682 = vld [vmem:[#allocation7 + $0x138] sm:$0xff]
    %v683 = vld [vmem:[#allocation7 + $0x140] sm:$0xff]
    %v684 = vld [vmem:[#allocation7 + $0x148] sm:$0xff]
    %v685 = vld [vmem:[#allocation7 + $0x150] sm:$0xff]
    %v686 = vld [vmem:[#allocation7 + $0x158] sm:$0xff]
    %v687 = vld [vmem:[#allocation7 + $0x160] sm:$0xff]
    %v688 = vld [vmem:[#allocation7 + $0x168] sm:$0xff]
    %v689 = vld [vmem:[#allocation7 + $0x170] sm:$0xff]
    %v690 = vld [vmem:[#allocation7 + $0x178] sm:$0xff]
    %v691 = vld [vmem:[#allocation7 + $0x180] sm:$0xff]
    %v692 = vld [vmem:[#allocation7 + $0x188] sm:$0xff]
    %v693 = vld [vmem:[#allocation7 + $0x190] sm:$0xff]
    %v694 = vld [vmem:[#allocation7 + $0x198] sm:$0xff]
    %v695 = vld [vmem:[#allocation7 + $0x1a0] sm:$0xff]
    %v696 = vld [vmem:[#allocation7 + $0x1a8] sm:$0xff]
    %v697 = vld [vmem:[#allocation7 + $0x1b0] sm:$0xff]
    %v698 = vld [vmem:[#allocation7 + $0x1b8] sm:$0xff]
    %v699 = vld [vmem:[#allocation7 + $0x1c0] sm:$0xff]
    %v700 = vld [vmem:[#allocation7 + $0x1c8] sm:$0xff]
    %v701 = vld [vmem:[#allocation7 + $0x1d0] sm:$0xff]
    %v702 = vld [vmem:[#allocation7 + $0x1d8] sm:$0xff]
    %v703 = vld [vmem:[#allocation7 + $0x1e0] sm:$0xff]
    %v704 = vld [vmem:[#allocation7 + $0x1e8] sm:$0xff]
    %v705 = vld [vmem:[#allocation7 + $0x1f0] sm:$0xff]
    %v706 = vld [vmem:[#allocation7 + $0x1f8] sm:$0xff]
    %v707 = vld [vmem:[%s4] sm:$0x3]
    %v709 = vlaneseq
    %v710 = vshrl.u32 %v709, 7
    %v711 = vsub.s32 0, %v710
    %v712 = vrot.slane %v707, %v711
    %v713 = vlaneseq
    %v714 = vshrl.u32 %v713, 7
    %v715 = vsub.s32 1, %v714
    %v716 = vrot.slane %v707, %v715
    %v783 = vunpack.c.l.b16 %v643
    %v784 = vunpack.c.h.b16 %v643
    %v785 = vunpack.c.l.b16 %v644
    %v786 = vunpack.c.h.b16 %v644
    %v787 = vunpack.c.l.b16 %v645
    %v788 = vunpack.c.h.b16 %v645
    %v789 = vunpack.c.l.b16 %v646
    %v790 = vunpack.c.h.b16 %v646
    %v791 = vunpack.c.l.b16 %v647
    %v792 = vunpack.c.h.b16 %v647
    %v793 = vunpack.c.l.b16 %v648
    %v794 = vunpack.c.h.b16 %v648
    %v795 = vunpack.c.l.b16 %v649
    %v796 = vunpack.c.h.b16 %v649
    %v797 = vunpack.c.l.b16 %v650
    %v798 = vunpack.c.h.b16 %v650
    %v799 = vunpack.c.l.b16 %v651
    %v800 = vunpack.c.h.b16 %v651
    %v801 = vunpack.c.l.b16 %v652
    %v802 = vunpack.c.h.b16 %v652
    %v803 = vunpack.c.l.b16 %v653
    %v804 = vunpack.c.h.b16 %v653
    %v805 = vunpack.c.l.b16 %v654
    %v806 = vunpack.c.h.b16 %v654
    %v807 = vunpack.c.l.b16 %v655
    %v808 = vunpack.c.h.b16 %v655
    %v809 = vunpack.c.l.b16 %v656
    %v810 = vunpack.c.h.b16 %v656
    %v811 = vunpack.c.l.b16 %v657
    %v812 = vunpack.c.h.b16 %v657
    %v813 = vunpack.c.l.b16 %v658
    %v814 = vunpack.c.h.b16 %v658
    %v815 = vunpack.c.l.b16 %v659
    %v816 = vunpack.c.h.b16 %v659
    %v817 = vunpack.c.l.b16 %v660
    %v818 = vunpack.c.h.b16 %v660
    %v819 = vunpack.c.l.b16 %v661
    %v820 = vunpack.c.h.b16 %v661
    %v821 = vunpack.c.l.b16 %v662
    %v822 = vunpack.c.h.b16 %v662
    %v823 = vunpack.c.l.b16 %v663
    %v824 = vunpack.c.h.b16 %v663
    %v825 = vunpack.c.l.b16 %v664
    %v826 = vunpack.c.h.b16 %v664
    %v827 = vunpack.c.l.b16 %v665
    %v828 = vunpack.c.h.b16 %v665
    %v829 = vunpack.c.l.b16 %v666
    %v830 = vunpack.c.h.b16 %v666
    %v831 = vunpack.c.l.b16 %v667
    %v832 = vunpack.c.h.b16 %v667
    %v833 = vunpack.c.l.b16 %v668
    %v834 = vunpack.c.h.b16 %v668
    %v835 = vunpack.c.l.b16 %v669
    %v836 = vunpack.c.h.b16 %v669
    %v837 = vunpack.c.l.b16 %v670
    %v838 = vunpack.c.h.b16 %v670
    %v839 = vunpack.c.l.b16 %v671
    %v840 = vunpack.c.h.b16 %v671
    %v841 = vunpack.c.l.b16 %v672
    %v842 = vunpack.c.h.b16 %v672
    %v843 = vunpack.c.l.b16 %v673
    %v844 = vunpack.c.h.b16 %v673
    %v845 = vunpack.c.l.b16 %v674
    %v846 = vunpack.c.h.b16 %v674
    %v847 = vunpack.c.l.b16 %v675
    %v848 = vunpack.c.h.b16 %v675
    %v849 = vunpack.c.l.b16 %v676
    %v850 = vunpack.c.h.b16 %v676
    %v851 = vunpack.c.l.b16 %v677
    %v852 = vunpack.c.h.b16 %v677
    %v853 = vunpack.c.l.b16 %v678
    %v854 = vunpack.c.h.b16 %v678
    %v855 = vunpack.c.l.b16 %v679
    %v856 = vunpack.c.h.b16 %v679
    %v857 = vunpack.c.l.b16 %v680
    %v858 = vunpack.c.h.b16 %v680
    %v859 = vunpack.c.l.b16 %v681
    %v860 = vunpack.c.h.b16 %v681
    %v861 = vunpack.c.l.b16 %v682
    %v862 = vunpack.c.h.b16 %v682
    %v863 = vunpack.c.l.b16 %v683
    %v864 = vunpack.c.h.b16 %v683
    %v865 = vunpack.c.l.b16 %v684
    %v866 = vunpack.c.h.b16 %v684
    %v867 = vunpack.c.l.b16 %v685
    %v868 = vunpack.c.h.b16 %v685
    %v869 = vunpack.c.l.b16 %v686
    %v870 = vunpack.c.h.b16 %v686
    %v871 = vunpack.c.l.b16 %v687
    %v872 = vunpack.c.h.b16 %v687
    %v873 = vunpack.c.l.b16 %v688
    %v874 = vunpack.c.h.b16 %v688
    %v875 = vunpack.c.l.b16 %v689
    %v876 = vunpack.c.h.b16 %v689
    %v877 = vunpack.c.l.b16 %v690
    %v878 = vunpack.c.h.b16 %v690
    %v879 = vunpack.c.l.b16 %v691
    %v880 = vunpack.c.h.b16 %v691
    %v881 = vunpack.c.l.b16 %v692
    %v882 = vunpack.c.h.b16 %v692
    %v883 = vunpack.c.l.b16 %v693
    %v884 = vunpack.c.h.b16 %v693
    %v885 = vunpack.c.l.b16 %v694
    %v886 = vunpack.c.h.b16 %v694
    %v887 = vunpack.c.l.b16 %v695
    %v888 = vunpack.c.h.b16 %v695
    %v889 = vunpack.c.l.b16 %v696
    %v890 = vunpack.c.h.b16 %v696
    %v891 = vunpack.c.l.b16 %v697
    %v892 = vunpack.c.h.b16 %v697
    %v893 = vunpack.c.l.b16 %v698
    %v894 = vunpack.c.h.b16 %v698
    %v895 = vunpack.c.l.b16 %v699
    %v896 = vunpack.c.h.b16 %v699
    %v897 = vunpack.c.l.b16 %v700
    %v898 = vunpack.c.h.b16 %v700
    %v899 = vunpack.c.l.b16 %v701
    %v900 = vunpack.c.h.b16 %v701
    %v901 = vunpack.c.l.b16 %v702
    %v902 = vunpack.c.h.b16 %v702
    %v903 = vunpack.c.l.b16 %v703
    %v904 = vunpack.c.h.b16 %v703
    %v905 = vunpack.c.l.b16 %v704
    %v906 = vunpack.c.h.b16 %v704
    %v907 = vunpack.c.l.b16 %v705
    %v908 = vunpack.c.h.b16 %v705
    %v909 = vunpack.c.l.b16 %v706
    %v910 = vunpack.c.h.b16 %v706
    %v911 = vpack.c.b16 %v785, %v783
    %v912 = vpack.c.b16 %v786, %v784
    %v913 = vpack.c.b16 %v789, %v787
    %v914 = vpack.c.b16 %v790, %v788
    %v915 = vpack.c.b16 %v793, %v791
    %v916 = vpack.c.b16 %v794, %v792
    %v917 = vpack.c.b16 %v797, %v795
    %v918 = vpack.c.b16 %v798, %v796
    %v919 = vpack.c.b16 %v801, %v799
    %v920 = vpack.c.b16 %v802, %v800
    %v921 = vpack.c.b16 %v805, %v803
    %v922 = vpack.c.b16 %v806, %v804
    %v923 = vpack.c.b16 %v809, %v807
    %v924 = vpack.c.b16 %v810, %v808
    %v925 = vpack.c.b16 %v813, %v811
    %v926 = vpack.c.b16 %v814, %v812
    %v927 = vpack.c.b16 %v817, %v815
    %v928 = vpack.c.b16 %v818, %v816
    %v929 = vpack.c.b16 %v821, %v819
    %v930 = vpack.c.b16 %v822, %v820
    %v931 = vpack.c.b16 %v825, %v823
    %v932 = vpack.c.b16 %v826, %v824
    %v933 = vpack.c.b16 %v829, %v827
    %v934 = vpack.c.b16 %v830, %v828
    %v935 = vpack.c.b16 %v833, %v831
    %v936 = vpack.c.b16 %v834, %v832
    %v937 = vpack.c.b16 %v837, %v835
    %v938 = vpack.c.b16 %v838, %v836
    %v939 = vpack.c.b16 %v841, %v839
    %v940 = vpack.c.b16 %v842, %v840
    %v941 = vpack.c.b16 %v845, %v843
    %v942 = vpack.c.b16 %v846, %v844
    %v943 = vpack.c.b16 %v849, %v847
    %v944 = vpack.c.b16 %v850, %v848
    %v945 = vpack.c.b16 %v853, %v851
    %v946 = vpack.c.b16 %v854, %v852
    %v947 = vpack.c.b16 %v857, %v855
    %v948 = vpack.c.b16 %v858, %v856
    %v949 = vpack.c.b16 %v861, %v859
    %v950 = vpack.c.b16 %v862, %v860
    %v951 = vpack.c.b16 %v865, %v863
    %v952 = vpack.c.b16 %v866, %v864
    %v953 = vpack.c.b16 %v869, %v867
    %v954 = vpack.c.b16 %v870, %v868
    %v955 = vpack.c.b16 %v873, %v871
    %v956 = vpack.c.b16 %v874, %v872
    %v957 = vpack.c.b16 %v877, %v875
    %v958 = vpack.c.b16 %v878, %v876
    %v959 = vpack.c.b16 %v881, %v879
    %v960 = vpack.c.b16 %v882, %v880
    %v961 = vpack.c.b16 %v885, %v883
    %v962 = vpack.c.b16 %v886, %v884
    %v963 = vpack.c.b16 %v889, %v887
    %v964 = vpack.c.b16 %v890, %v888
    %v965 = vpack.c.b16 %v893, %v891
    %v966 = vpack.c.b16 %v894, %v892
    %v967 = vpack.c.b16 %v897, %v895
    %v968 = vpack.c.b16 %v898, %v896
    %v969 = vpack.c.b16 %v901, %v899
    %v970 = vpack.c.b16 %v902, %v900
    %v971 = vpack.c.b16 %v905, %v903
    %v972 = vpack.c.b16 %v906, %v904
    %v973 = vpack.c.b16 %v909, %v907
    %v974 = vpack.c.b16 %v910, %v908
    %1039 = vmatprep.subr.bf16.mxu0 %v912
    %1040 = vmatpush1.bf16.msra.mxu0 %v911
    %1041 = vmatprep.subr.bf16.mxu0 %v914
    %1042 = vmatpush1.bf16.msra.mxu0 %v913
    %1043 = vmatprep.subr.bf16.mxu0 %v916
    %1044 = vmatpush1.bf16.msra.mxu0 %v915
    %1045 = vmatprep.subr.bf16.mxu0 %v918
    %1046 = vmatpush1.bf16.msra.mxu0 %v917
    %1047 = vmatprep.subr.bf16.mxu0 %v920
    %1048 = vmatpush1.bf16.msra.mxu0 %v919
    %1049 = vmatprep.subr.bf16.mxu0 %v922
    %1050 = vmatpush1.bf16.msra.mxu0 %v921
    %1051 = vmatprep.subr.bf16.mxu0 %v924
    %1052 = vmatpush1.bf16.msra.mxu0 %v923
    %1053 = vmatprep.subr.bf16.mxu0 %v926
    %1054 = vmatpush1.bf16.msra.mxu0 %v925
    %1055 = vmatprep.subr.bf16.mxu0 %v928
    %1056 = vmatpush1.bf16.msra.mxu0 %v927
    %1057 = vmatprep.subr.bf16.mxu0 %v930
    %1058 = vmatpush1.bf16.msra.mxu0 %v929
    %1059 = vmatprep.subr.bf16.mxu0 %v932
    %1060 = vmatpush1.bf16.msra.mxu0 %v931
    %1061 = vmatprep.subr.bf16.mxu0 %v934
    %1062 = vmatpush1.bf16.msra.mxu0 %v933
    %1063 = vmatprep.subr.bf16.mxu0 %v936
    %1064 = vmatpush1.bf16.msra.mxu0 %v935
    %1065 = vmatprep.subr.bf16.mxu0 %v938
    %1066 = vmatpush1.bf16.msra.mxu0 %v937
    %1067 = vmatprep.subr.bf16.mxu0 %v940
    %1068 = vmatpush1.bf16.msra.mxu0 %v939
    %1069 = vmatprep.subr.bf16.mxu0 %v942
    %1070 = vmatpush1.bf16.msra.mxu0 %v941
    %1071 = vmatprep.mubr.bf16.mxu0 %v636
    %1072 = vmatmul.mubr.bf16.gmra.mrb[0].mxu0 %v635
    %v1073 = vpop.f32.mrb[0].mxu0
    %v1074 = vadd.f32 %v712, %v1073
    %v1075 = vpop.f32.mrb[0].mxu0
    %v1076 = vadd.f32 %v716, %v1075
    %v1077 = vpop.f32.mrb[0].mxu0
    %v1078 = vadd.f32 %v712, %v1077
    %v1079 = vpop.f32.mrb[0].mxu0
    %v1080 = vadd.f32 %v716, %v1079
    %1081 = vmatprep.mubr.bf16.mxu0 %v640
    %1082 = vmatmul.mubr.bf16.gmra.mrb[0].mxu0 %v639
    %v1083 = vpop.f32.mrb[0].mxu0
    %v1084 = vadd.f32 %v712, %v1083
    %v1085 = vpop.f32.mrb[0].mxu0
    %v1086 = vadd.f32 %v716, %v1085
    %v1087 = vpop.f32.mrb[0].mxu0
    %v1088 = vadd.f32 %v712, %v1087
    %v1089 = vpop.f32.mrb[0].mxu0
    %v1090 = vadd.f32 %v716, %v1089
    %1091 = vdwg.mxu0
    %1092 = vmatprep.subr.bf16.mxu0 %v944
    %1093 = vmatpush1.bf16.msra.mxu0 %v943
    %1094 = vmatprep.subr.bf16.mxu0 %v946
    %1095 = vmatpush1.bf16.msra.mxu0 %v945
    %1096 = vmatprep.subr.bf16.mxu0 %v948
    %1097 = vmatpush1.bf16.msra.mxu0 %v947
    %1098 = vmatprep.subr.bf16.mxu0 %v950
    %1099 = vmatpush1.bf16.msra.mxu0 %v949
    %1100 = vmatprep.subr.bf16.mxu0 %v952
    %1101 = vmatpush1.bf16.msra.mxu0 %v951
    %1102 = vmatprep.subr.bf16.mxu0 %v954
    %1103 = vmatpush1.bf16.msra.mxu0 %v953
    %1104 = vmatprep.subr.bf16.mxu0 %v956
    %1105 = vmatpush1.bf16.msra.mxu0 %v955
    %1106 = vmatprep.subr.bf16.mxu0 %v958
    %1107 = vmatpush1.bf16.msra.mxu0 %v957
    %1108 = vmatprep.subr.bf16.mxu0 %v960
    %1109 = vmatpush1.bf16.msra.mxu0 %v959
    %1110 = vmatprep.subr.bf16.mxu0 %v962
    %1111 = vmatpush1.bf16.msra.mxu0 %v961
    %1112 = vmatprep.subr.bf16.mxu0 %v964
    %1113 = vmatpush1.bf16.msra.mxu0 %v963
    %1114 = vmatprep.subr.bf16.mxu0 %v966
    %1115 = vmatpush1.bf16.msra.mxu0 %v965
    %1116 = vmatprep.subr.bf16.mxu0 %v968
    %1117 = vmatpush1.bf16.msra.mxu0 %v967
    %1118 = vmatprep.subr.bf16.mxu0 %v970
    %1119 = vmatpush1.bf16.msra.mxu0 %v969
    %1120 = vmatprep.subr.bf16.mxu0 %v972
    %1121 = vmatpush1.bf16.msra.mxu0 %v971
    %1122 = vmatprep.subr.bf16.mxu0 %v974
    %1123 = vmatpush1.bf16.msra.mxu0 %v973
    %1124 = vmatprep.mubr.bf16.mxu0 %v638
    %1125 = vmatmul.mubr.bf16.gmra.mrb[0].mxu0 %v637
    %v1126 = vpop.f32.mrb[0].mxu0
    %v1127 = vadd.f32 %v1074, %v1126
    %v1128 = vpop.f32.mrb[0].mxu0
    %v1129 = vadd.f32 %v1076, %v1128
    %v1130 = vpop.f32.mrb[0].mxu0
    %v1131 = vadd.f32 %v1078, %v1130
    %v1132 = vpop.f32.mrb[0].mxu0
    %v1133 = vadd.f32 %v1080, %v1132
    %1134 = vmatprep.mubr.bf16.mxu0 %v642
    %1135 = vmatmul.mubr.bf16.gmra.mrb[0].mxu0 %v641
    %v1136 = vpop.f32.mrb[0].mxu0
    %v1137 = vadd.f32 %v1084, %v1136
    %v1138 = vpop.f32.mrb[0].mxu0
    %v1139 = vadd.f32 %v1086, %v1138
    %v1140 = vpop.f32.mrb[0].mxu0
    %v1141 = vadd.f32 %v1088, %v1140
    %v1142 = vpop.f32.mrb[0].mxu0
    %v1143 = vadd.f32 %v1090, %v1142
    %1144 = vdwg.mxu0
    %v1145 = vmax.f32 %v1127, 0.0
    %v1146 = vmax.f32 %v1129, 0.0
    %v1147 = vmax.f32 %v1131, 0.0
    %v1148 = vmax.f32 %v1133, 0.0
    %v1149 = vmax.f32 %v1137, 0.0
    %v1150 = vmax.f32 %v1139, 0.0
    %v1151 = vmax.f32 %v1141, 0.0
    %v1152 = vmax.f32 %v1143, 0.0
    %v1153 = vpack.c.bf16 %v1147, %v1145
    %v1154 = vpack.c.bf16 %v1148, %v1146
    %v1155 = vpack.c.bf16 %v1151, %v1149
    %v1156 = vpack.c.bf16 %v1152, %v1150
    %v1157 = vld [vmem:[#allocation8] sm:$0xf]
    %v1158 = vld [vmem:[#allocation8 + $0x4] sm:$0xf]
    %v1159 = vld [vmem:[#allocation8 + $0x8] sm:$0xf]
    %v1160 = vld [vmem:[#allocation8 + $0xc] sm:$0xf]
    %v1161 = vld [vmem:[#allocation8 + $0x10] sm:$0xf]
    %v1162 = vld [vmem:[#allocation8 + $0x14] sm:$0xf]
    %v1163 = vld [vmem:[#allocation8 + $0x18] sm:$0xf]
    %v1164 = vld [vmem:[#allocation8 + $0x1c] sm:$0xf]
    %v1165 = vld [vmem:[#allocation8 + $0x20] sm:$0xf]
    %v1166 = vld [vmem:[#allocation8 + $0x24] sm:$0xf]
    %v1167 = vld [vmem:[#allocation8 + $0x28] sm:$0xf]
    %v1168 = vld [vmem:[#allocation8 + $0x2c] sm:$0xf]
    %v1169 = vld [vmem:[#allocation8 + $0x30] sm:$0xf]
    %v1170 = vld [vmem:[#allocation8 + $0x34] sm:$0xf]
    %v1171 = vld [vmem:[#allocation8 + $0x38] sm:$0xf]
    %v1172 = vld [vmem:[#allocation8 + $0x3c] sm:$0xf]
    %v1173 = vld [vmem:[#allocation8 + $0x40] sm:$0xf]
    %v1174 = vld [vmem:[#allocation8 + $0x44] sm:$0xf]
    %v1175 = vld [vmem:[#allocation8 + $0x48] sm:$0xf]
    %v1176 = vld [vmem:[#allocation8 + $0x4c] sm:$0xf]
    %v1177 = vld [vmem:[#allocation8 + $0x50] sm:$0xf]
    %v1178 = vld [vmem:[#allocation8 + $0x54] sm:$0xf]
    %v1179 = vld [vmem:[#allocation8 + $0x58] sm:$0xf]
    %v1180 = vld [vmem:[#allocation8 + $0x5c] sm:$0xf]
    %v1181 = vld [vmem:[#allocation8 + $0x60] sm:$0xf]
    %v1182 = vld [vmem:[#allocation8 + $0x64] sm:$0xf]
    %v1183 = vld [vmem:[#allocation8 + $0x68] sm:$0xf]
    %v1184 = vld [vmem:[#allocation8 + $0x6c] sm:$0xf]
    %v1185 = vld [vmem:[#allocation8 + $0x70] sm:$0xf]
    %v1186 = vld [vmem:[#allocation8 + $0x74] sm:$0xf]
    %v1187 = vld [vmem:[#allocation8 + $0x78] sm:$0xf]
    %v1188 = vld [vmem:[#allocation8 + $0x7c] sm:$0xf]
    %v1189 = vld [vmem:[%s6] sm:$0x1]
    %v1191 = vlaneseq
    %v1192 = vshrl.u32 %v1191, 7
    %v1193 = vsub.s32 0, %v1192
    %v1194 = vrot.slane %v1189, %v1193
    %v1228 = vunpack.c.l.b16 %v1157
    %v1229 = vunpack.c.l.b16 %v1158
    %v1230 = vunpack.c.l.b16 %v1159
    %v1231 = vunpack.c.l.b16 %v1160
    %v1232 = vunpack.c.l.b16 %v1161
    %v1233 = vunpack.c.l.b16 %v1162
    %v1234 = vunpack.c.l.b16 %v1163
    %v1235 = vunpack.c.l.b16 %v1164
    %v1236 = vunpack.c.l.b16 %v1165
    %v1237 = vunpack.c.l.b16 %v1166
    %v1238 = vunpack.c.l.b16 %v1167
    %v1239 = vunpack.c.l.b16 %v1168
    %v1240 = vunpack.c.l.b16 %v1169
    %v1241 = vunpack.c.l.b16 %v1170
    %v1242 = vunpack.c.l.b16 %v1171
    %v1243 = vunpack.c.l.b16 %v1172
    %v1244 = vunpack.c.l.b16 %v1173
    %v1245 = vunpack.c.l.b16 %v1174
    %v1246 = vunpack.c.l.b16 %v1175
    %v1247 = vunpack.c.l.b16 %v1176
    %v1248 = vunpack.c.l.b16 %v1177
    %v1249 = vunpack.c.l.b16 %v1178
    %v1250 = vunpack.c.l.b16 %v1179
    %v1251 = vunpack.c.l.b16 %v1180
    %v1252 = vunpack.c.l.b16 %v1181
    %v1253 = vunpack.c.l.b16 %v1182
    %v1254 = vunpack.c.l.b16 %v1183
    %v1255 = vunpack.c.l.b16 %v1184
    %v1256 = vunpack.c.l.b16 %v1185
    %v1257 = vunpack.c.l.b16 %v1186
    %v1258 = vunpack.c.l.b16 %v1187
    %v1259 = vunpack.c.l.b16 %v1188
    %v1260 = vpack.c.b16 %v1229, %v1228
    %v1261 = vpack.c.b16 %v1231, %v1230
    %v1262 = vpack.c.b16 %v1233, %v1232
    %v1263 = vpack.c.b16 %v1235, %v1234
    %v1264 = vpack.c.b16 %v1237, %v1236
    %v1265 = vpack.c.b16 %v1239, %v1238
    %v1266 = vpack.c.b16 %v1241, %v1240
    %v1267 = vpack.c.b16 %v1243, %v1242
    %v1268 = vpack.c.b16 %v1245, %v1244
    %v1269 = vpack.c.b16 %v1247, %v1246
    %v1270 = vpack.c.b16 %v1249, %v1248
    %v1271 = vpack.c.b16 %v1251, %v1250
    %v1272 = vpack.c.b16 %v1253, %v1252
    %v1273 = vpack.c.b16 %v1255, %v1254
    %v1274 = vpack.c.b16 %v1257, %v1256
    %v1275 = vpack.c.b16 %v1259, %v1258
    %1292 = vmatprep.subr.bf16.mxu0 0
    %1293 = vmatpush1.bf16.msra.mxu0 %v1260
    %1294 = vmatprep.subr.bf16.mxu0 0
    %1295 = vmatpush1.bf16.msra.mxu0 %v1261
    %1296 = vmatprep.subr.bf16.mxu0 0
    %1297 = vmatpush1.bf16.msra.mxu0 %v1262
    %1298 = vmatprep.subr.bf16.mxu0 0
    %1299 = vmatpush1.bf16.msra.mxu0 %v1263
    %1300 = vmatprep.subr.bf16.mxu0 0
    %1301 = vmatpush1.bf16.msra.mxu0 %v1264
    %1302 = vmatprep.subr.bf16.mxu0 0
    %1303 = vmatpush1.bf16.msra.mxu0 %v1265
    %1304 = vmatprep.subr.bf16.mxu0 0
    %1305 = vmatpush1.bf16.msra.mxu0 %v1266
    %1306 = vmatprep.subr.bf16.mxu0 0
    %1307 = vmatpush1.bf16.msra.mxu0 %v1267
    %1308 = vmatprep.subr.bf16.mxu0 0
    %1309 = vmatpush1.bf16.msra.mxu0 %v1268
    %1310 = vmatprep.subr.bf16.mxu0 0
    %1311 = vmatpush1.bf16.msra.mxu0 %v1269
    %1312 = vmatprep.subr.bf16.mxu0 0
    %1313 = vmatpush1.bf16.msra.mxu0 %v1270
    %1314 = vmatprep.subr.bf16.mxu0 0
    %1315 = vmatpush1.bf16.msra.mxu0 %v1271
    %1316 = vmatprep.subr.bf16.mxu0 0
    %1317 = vmatpush1.bf16.msra.mxu0 %v1272
    %1318 = vmatprep.subr.bf16.mxu0 0
    %1319 = vmatpush1.bf16.msra.mxu0 %v1273
    %1320 = vmatprep.subr.bf16.mxu0 0
    %1321 = vmatpush1.bf16.msra.mxu0 %v1274
    %1322 = vmatprep.subr.bf16.mxu0 0
    %1323 = vmatpush1.bf16.msra.mxu0 %v1275
    %1324 = vmatprep.mubr.bf16.mxu0 %v1154
    %1325 = vmatmul.mubr.bf16.gmra.mrb[0].mxu0 %v1153
    %v1326 = vpop.f32.mrb[0].mxu0
    %v1327 = vadd.f32 %v1194, %v1326
    %v1328 = vpop.f32.mrb[0].mxu0
    %v1329 = vpop.f32.mrb[0].mxu0
    %v1330 = vadd.f32 %v1194, %v1329
    %v1331 = vpop.f32.mrb[0].mxu0
    %1332 = vmatprep.mubr.bf16.mxu0 %v1156
    %1333 = vmatmul.mubr.bf16.gmra.mrb[0].mxu0 %v1155
    %v1334 = vpop.f32.mrb[0].mxu0
    %v1335 = vadd.f32 %v1194, %v1334
    %v1336 = vpop.f32.mrb[0].mxu0
    %v1337 = vpop.f32.mrb[0].mxu0
    %v1338 = vadd.f32 %v1194, %v1337
    %v1339 = vpop.f32.mrb[0].mxu0
    %1340 = vdwg.mxu0
    %1341 = vst [vmem:[#allocation10] sm:$0xff] %v1327
    %1342 = vst [vmem:[#allocation10 + $0x8] sm:$0xff] %v1330
    %1343 = vst [vmem:[#allocation10 + $0x10] sm:$0xff] %v1335
    %1344 = vst [vmem:[#allocation10 + $0x18] sm:$0xff] %v1338
    // Predicated region
    $region46: #{tpu_custom_call.1} parent=1 // pred_check
      _
    $region47: #{tpu_custom_call.1} parent=1 // pred_check_branch
      %1346 = sbr.rel (0) target = $region49
    $region48: #{tpu_custom_call.1} parent=1 // pred_region
      %s1348 = ssub.s32 512, 512
      %1349 = vsyncadd [#allocation4], %s1348
      %s1350 = sshll.u32 [#allocation10], 4
      %s1351 = int_to_ptr.vmem [resolvable:$true] %s1350
      %1356 = dma.vmem_to_hbm [thread:$0]  %s1351, 512, %s7, [#allocation4], 128, 128, 8
    $region49: #{tpu_custom_call.1} parent=1 // pred_fallthru
      _
    // Predicated region
    $region50: #{tpu_custom_call.1} parent=1 // pred_check
      _
    $region51: #{tpu_custom_call.1} parent=1 // pred_check_branch
      %1358 = sbr.rel (0) target = $region53
    $region52: #{tpu_custom_call.1} parent=1 // pred_region
      %1359 = dma.done [#allocation4], 512
    $region53: #{tpu_custom_call.1} parent=1 // pred_fallthru
      _
    %1360 = vsyncpa [#allocation3], 1
    %1361 = vsyncpa [#allocation6], 1
    %1362 = vsyncpa [#allocation9], 1
    %1363 = vsyncpa [#allocation4], 1

</llo_original>
